<compile_context>
chip_gen: v6e
topology: v6e:2x2x1
jax: 0.10.0
libtpu: 0.0.40
codegen_flags: <defaults>
</compile_context>

<pallas_src>
import math

import jax
import jax.numpy as jnp
from jax.experimental import pallas as pl
from jax.experimental.pallas import tpu as pltpu


def _dma_copy_kernel(x_ref, o_ref, sem):
    """Whole-array HBM->HBM copy via a single async DMA (no vreg path)."""
    cp = pltpu.make_async_copy(x_ref, o_ref, sem)
    cp.start()
    cp.wait()


def _resolve_size(size, total):
    """torch.Tensor.view size resolution (single -1 allowed), host-side only."""
    size = list(size)
    neg = [i for i, s in enumerate(size) if s == -1]
    if len(neg) > 1:
        raise ValueError("only one dimension can be inferred (-1)")
    if neg:
        known = math.prod(s for s in size if s != -1)
        if known == 0 or total % known != 0:
            raise ValueError(f"cannot view {total} elements as {tuple(size)}")
        size[neg[0]] = total // known
    if math.prod(size) != total:
        raise ValueError(
            f"view of size {tuple(size)} is incompatible with {total} elements")
    return tuple(size)


def pallas_reshape(x, size):
    """Equivalent of `tensor.view(size)` for a contiguous tensor."""
    total = math.prod(x.shape)
    size = _resolve_size(size, total)

    if total == 0:
        return jnp.zeros(size, dtype=x.dtype)

    # TODO(synk): a view needs no data movement at all; if a pure-XLA result is
    # acceptable, `x.reshape(size)` (or input_output_aliases) removes even this
    # single DMA copy.

    LANE = 128
    flat = x.reshape(-1)  # metadata-level flatten of the contiguous stream
    if total % LANE == 0:
        # Lane-dense, tile-exact 2D slab -> dense HBM layout, one contiguous
        # DMA with no layout padding (rows need only be a multiple of 8 for a
        # perfectly dense layout; any sublane remainder wastes <4 KiB).
        copy_shape = (total // LANE, LANE)
    else:
        # Ragged element counts: copy the flat stream directly (still a single
        # DMA, no host-side padding).
        copy_shape = (total,)
    src = flat.reshape(copy_shape)

    out = pl.pallas_call(
        _dma_copy_kernel,
        out_shape=jax.ShapeDtypeStruct(copy_shape, x.dtype),
        in_specs=[pl.BlockSpec(memory_space=pl.ANY)],
        out_specs=pl.BlockSpec(memory_space=pl.ANY),
        scratch_shapes=[pltpu.SemaphoreType.DMA],
    )(src)

    return out.reshape(size)


if __name__ == "__main__":
    key = jax.random.PRNGKey(0)
    # NCHW activation: (batch=2, channels=4, 16, 16) -> 2048 elements.
    x = jax.random.normal(key, (2, 4, 16, 16), dtype=jnp.float32)

    # Case 1: explicit target size (same total element count).
    target_size = (2, 64, 16)
    y = jax.block_until_ready(pallas_reshape(x, target_size))
    ref = x.reshape(target_size)
    assert y.shape == tuple(target_size)
    assert y.dtype == x.dtype
    assert bool(jnp.array_equal(jax.device_get(y), jax.device_get(ref)))

    # Case 2: -1 inference, like torch `tensor.view(2, -1)`.
    y2 = jax.block_until_ready(pallas_reshape(x, (2, -1)))
    assert y2.shape == (2, 1024)
    assert bool(jnp.array_equal(jax.device_get(y2),
                                jax.device_get(x.reshape(2, -1))))

    print("KERNEL_OK")
</pallas_src>

<mosaic_0001>
module attributes {stable_mosaic.version = 11 : i64} {
  func.func @_dma_copy_kernel(%arg0: memref<16x128xf32, #tpu.memory_space<any>>, %arg1: memref<16x128xf32, #tpu.memory_space<any>>, %arg2: memref<!tpu.dma_semaphore, #tpu.memory_space<semaphore_mem>>) attributes {dimension_semantics = [], scalar_prefetch = 0 : i64, scratch_operands = 1 : i64, tpu.core_type = #tpu.core_type<tc>} {
    tpu.enqueue_dma source(%arg0 : memref<16x128xf32, #tpu.memory_space<any>>) target(%arg1 : memref<16x128xf32, #tpu.memory_space<any>>) target_semaphore(%arg2 : memref<!tpu.dma_semaphore, #tpu.memory_space<semaphore_mem>>)
    tpu.wait_dma2 semaphore(%arg2 : memref<!tpu.dma_semaphore, #tpu.memory_space<semaphore_mem>>) src(%arg0 : memref<16x128xf32, #tpu.memory_space<any>>) dst(%arg1 : memref<16x128xf32, #tpu.memory_space<any>>)
    return
  }
}

</mosaic_0001>

<llo_original>
// kernel: tpu_custom_call.1
$region0: #{tpu_custom_call.1}
  #allocation0 [shape = 'u32[]', space=smem, size = 0x4, offset = 0x4, fixed_abs, tag = 'smem constant byte address 0x4 - core index']
  #allocation1 [shape = 'u32[144,128]{1,0:T(1,128)}', space=vmem, size = 0x12000, scoped, tag = 'internal scratch']
  #allocation2 [shape = 's32[1]{0}', space=sflag, size = 0x4, scoped, tag = 'scratch operand']
  #allocation3 [shape = 's32[]', space=sflag, size = 0x4, offset = 0, fixed_abs, tag = 'sflag constant byte address 0x0 - dummy sync flag']
  #allocation4 [shape = 'u32[0]{0}', space=smem, size = 0, offset = 0, fixed_abs, tag = 'smem constant byte address 0x0 - null']
  %s0 = inlined_call_operand.hbm [shape: f32[16,128], index: 0, kind: input, shape index: {}]
  %s1 = inlined_call_operand.hbm [shape: f32[16,128], index: 1, kind: output, shape index: {}]
  %s2 = sld [smem:[#allocation0]]
  $region2: #{tpu_custom_call.1} parent=0
    _
  %s4 = ssub.s32 1, %s2
  %s5 = scalar_select 0, %s4, %s2
  %s7 = sshll.u32 1, 14
  %s8 = sxor.u32 4294967295, %s7
  %12 = dma.general %s0, 256, %s1, [#allocation2], 131072, [#allocation4], 0, 0
  %s13 = smul.u32 16, 1
  %s14 = sshll.u32 %s13, 4
  %15 = dma.done [#allocation2], %s14
  %16 = vsyncmov [#allocation2]
  %s17 = vpop.sfrf %16
  %p18 = scmp.eq.s32.totalorder %s17, 0
  %p19 = pneg %p18
  %21 = shalt.err (%p19)

</llo_original>
